<compile_context>
chip_gen: v6e
topology: v6e:2x2x1
jax: 0.10.0
libtpu: 0.0.40
codegen_flags: <defaults>
</compile_context>

<pallas_src>
import functools

import jax
import jax.numpy as jnp
import numpy as np
from jax.experimental import pallas as pl
from jax.experimental.pallas import tpu as pltpu

LANE = 128

# sRGB -> XYZ matrix (same constants as the PyTorch module)
_M = (
    (0.412453, 0.357580, 0.180423),
    (0.212671, 0.715160, 0.072169),
    (0.019334, 0.119193, 0.950227),
)
_THRESH = 0.008856

# Fold the per-row division by sum(M[i]) and the (x+1)*0.5 rescale into the matrix:
#   xyz_i = sum_j (M[i][j]/rowsum_i) * (x_j + 1) * 0.5
#         = sum_j (0.5*M[i][j]/rowsum_i) * x_j + 0.5        (normalized rows sum to 1)
_A = tuple(tuple(0.5 * v / sum(row) for v in row) for row in _M)


def _round_up(x, m):
    return (x + m - 1) // m * m


def _avg_lab_kernel(fake_ref, real_ref, mf_ref, mr_ref, out_ref, acc_ref):
    t = pl.program_id(1)
    nt = pl.num_programs(1)

    @pl.when(t == 0)
    def _init():
        acc_ref[...] = jnp.zeros_like(acc_ref)

    def f_cube(v):
        # f(x) = x^(1/3) if x > thresh else 7.787x + 0.137931
        cr = jnp.power(jnp.maximum(v, 1e-12), jnp.float32(1.0 / 3.0))
        return jnp.where(v > _THRESH, cr, 7.787 * v + 0.137931)

    def accumulate(img_ref, m_ref, base):
        # img_ref block: (1, 3, tile_rows, 128); m_ref block: (1, tile_rows, 128)
        r = img_ref[0, 0].astype(jnp.float32)    # raw generator output in [-1, 1]
        g = img_ref[0, 1].astype(jnp.float32)
        bl = img_ref[0, 2].astype(jnp.float32)

        x = _A[0][0] * r + _A[0][1] * g + _A[0][2] * bl + 0.5
        y = _A[1][0] * r + _A[1][1] * g + _A[1][2] * bl + 0.5
        z = _A[2][0] * r + _A[2][1] * g + _A[2][2] * bl + 0.5

        fx, fy, fz = f_cube(x), f_cube(y), f_cube(z)
        L = jnp.where(y > _THRESH, 116.0 * fy - 16.0, 903.3 * y)
        a = 500.0 * (fx - fy)
        bb = 200.0 * (fy - fz)

        m = m_ref[0].astype(jnp.float32)         # (tile_rows, 128)

        # Per-lane partial sums (sublane reduction only; cross-lane reduce is done
        # in the JAX wrapper on the lane-dense output).
        acc_ref[base + 0:base + 1, :] += jnp.sum(L * m, axis=0, keepdims=True)
        acc_ref[base + 1:base + 2, :] += jnp.sum(a * m, axis=0, keepdims=True)
        acc_ref[base + 2:base + 3, :] += jnp.sum(bb * m, axis=0, keepdims=True)
        acc_ref[base + 3:base + 4, :] += jnp.sum(m, axis=0, keepdims=True)

    accumulate(fake_ref, mf_ref, 0)
    accumulate(real_ref, mr_ref, 4)

    @pl.when(t == nt - 1)
    def _final():
        out_ref[0] = acc_ref[...]


@functools.partial(jax.jit, static_argnames=("tile_rows",))
def avg_lab_loss(fake, real, mask_fake, mask_real, *, tile_rows=512):
    B, C, H, W = fake.shape
    assert C == 3
    HW = H * W

    rows_raw = pl.cdiv(HW, LANE)
    # Tile granularity 32 rows is safe for f32/bf16 images and int8 masks.
    tr = min(tile_rows, _round_up(rows_raw, 32))
    tr = _round_up(tr, 32)
    n_rows = _round_up(rows_raw, tr)
    n_tiles = n_rows // tr
    hw_pad = n_rows * LANE

    def prep_img(x):
        x = x.reshape(B, 3, HW)
        if hw_pad != HW:
            x = jnp.pad(x, ((0, 0), (0, 0), (0, hw_pad - HW)))
        return x.reshape(B, 3, n_rows, LANE)

    def prep_mask(m):
        if m.dtype == jnp.bool_:
            m = m.astype(jnp.int8)        # keep HBM traffic low; cast in-kernel
        m = m.reshape(B, HW)
        if hw_pad != HW:
            m = jnp.pad(m, ((0, 0), (0, hw_pad - HW)))
        return m.reshape(B, n_rows, LANE)

    fake2, real2 = prep_img(fake), prep_img(real)
    mf2, mr2 = prep_mask(mask_fake), prep_mask(mask_real)

    img_spec = pl.BlockSpec((1, 3, tr, LANE), lambda b, t: (b, 0, t, 0))
    msk_spec = pl.BlockSpec((1, tr, LANE), lambda b, t: (b, t, 0))
    out_spec = pl.BlockSpec((1, 8, LANE), lambda b, t: (b, 0, 0))

    # Per-batch, per-lane partial sums:
    # rows 0..3 = fake [sum(L*m), sum(a*m), sum(b*m), sum(m)], rows 4..7 = real.
    sums = pl.pallas_call(
        _avg_lab_kernel,
        out_shape=jax.ShapeDtypeStruct((B, 8, LANE), jnp.float32),
        grid_spec=pltpu.PrefetchScalarGridSpec(
            num_scalar_prefetch=0,
            grid=(B, n_tiles),
            in_specs=[img_spec, img_spec, msk_spec, msk_spec],
            out_specs=out_spec,
            scratch_shapes=[pltpu.VMEM((8, LANE), jnp.float32)],
        ),
        compiler_params=pltpu.CompilerParams(
            dimension_semantics=("parallel", "arbitrary"),
            vmem_limit_bytes=32 * 1024 * 1024,
        ),
    )(fake2, real2, mf2, mr2)

    s = jnp.sum(sums, axis=-1)                      # (B, 8)

    def masked_avg(lab_sums, msum):
        msum = jnp.where(msum == 0.0, 1.0, msum)
        return lab_sums / msum[:, None]

    fake_avg = masked_avg(s[:, 0:3], s[:, 3])       # (B, 3)
    real_avg = masked_avg(s[:, 4:7], s[:, 7])       # (B, 3)
    # nn.L1Loss(): mean over the (B, 3, 1, 1) averaged-Lab tensors.
    return jnp.mean(jnp.abs(fake_avg - real_avg))


# ----------------------- pure-JAX reference (for checking) -----------------------
def _ref_f(t):
    return jnp.where(t > _THRESH, jnp.power(jnp.maximum(t, 1e-12), 1.0 / 3.0),
                     7.787 * t + 0.137931)


def _ref_rgb2xyz(rgb):
    M = jnp.asarray(_M, jnp.float32)
    out = jnp.einsum('nc,bchw->bnhw', M, rgb)
    return out / M.sum(axis=1)[None, :, None, None]


def _ref_xyz2lab(xyz):
    f = _ref_f(xyz)
    y = xyz[:, 1]
    L = jnp.where(y > _THRESH, 116.0 * f[:, 1] - 16.0, 903.3 * y)
    a = 500.0 * (f[:, 0] - f[:, 1])
    b = 200.0 * (f[:, 1] - f[:, 2])
    return jnp.stack([L, a, b], axis=1)


def _ref_avg(lab, mask):
    s = jnp.sum(lab * mask, axis=(2, 3), keepdims=True)
    ms = jnp.sum(mask, axis=(2, 3), keepdims=True)
    ms = jnp.where(ms == 0, 1.0, ms)
    return s / ms


def avg_lab_loss_ref(fake, real, mask_fake, mask_real):
    fl = _ref_xyz2lab(_ref_rgb2xyz((fake + 1) / 2.0))
    rl = _ref_xyz2lab(_ref_rgb2xyz((real + 1) / 2.0))
    fa = _ref_avg(fl, mask_fake)
    ra = _ref_avg(rl, mask_real)
    return jnp.mean(jnp.abs(fa - ra))


if __name__ == "__main__":
    B, C, H, W = 2, 3, 16, 16
    key = jax.random.PRNGKey(0)
    k1, k2, k3, k4 = jax.random.split(key, 4)

    # fake/real in [-1, 1] (tanh-like generator output); binary hair masks as int8
    # (exercising the low-bandwidth mask path).
    fake = jax.random.uniform(k1, (B, C, H, W), jnp.float32, -1.0, 1.0)
    real = jax.random.uniform(k2, (B, C, H, W), jnp.float32, -1.0, 1.0)
    mask_fake = (jax.random.uniform(k3, (B, 1, H, W)) > 0.5).astype(jnp.int8)
    mask_real = (jax.random.uniform(k4, (B, 1, H, W)) > 0.5).astype(jnp.int8)

    loss = jax.block_until_ready(avg_lab_loss(fake, real, mask_fake, mask_real))

    ref = jax.block_until_ready(
        avg_lab_loss_ref(fake, real,
                         mask_fake.astype(jnp.float32),
                         mask_real.astype(jnp.float32)))
    np.testing.assert_allclose(np.asarray(loss), np.asarray(ref),
                               rtol=1e-4, atol=1e-4)

    print("KERNEL_OK")
</pallas_src>

<mosaic_0001>
module attributes {stable_mosaic.version = 11 : i64} {
  func.func @_avg_lab_kernel(%arg0: i32, %arg1: i32, %arg2: memref<1x3x32x128xf32, #tpu.memory_space<vmem>>, %arg3: memref<1x3x32x128xf32, #tpu.memory_space<vmem>>, %arg4: memref<1x32x128xi8, #tpu.memory_space<vmem>>, %arg5: memref<1x32x128xi8, #tpu.memory_space<vmem>>, %arg6: memref<1x8x128xf32, #tpu.memory_space<vmem>>, %arg7: memref<8x128xf32, #tpu.memory_space<vmem>>) attributes {dimension_semantics = [#tpu.dimension_semantics<parallel>, #tpu.dimension_semantics<arbitrary>], iteration_bounds = array<i64: 2, 1>, scalar_prefetch = 0 : i64, scratch_operands = 1 : i64, tpu.core_type = #tpu.core_type<tc>, window_params = [{transform_indices = @transform_0, window_bounds = array<i64: 1, 3, 32, 128>}, {transform_indices = @transform_1, window_bounds = array<i64: 1, 3, 32, 128>}, {transform_indices = @transform_2, window_bounds = array<i64: 1, 32, 128>}, {transform_indices = @transform_3, window_bounds = array<i64: 1, 32, 128>}, {transform_indices = @transform_4, window_bounds = array<i64: 1, 8, 128>}]} {
    %c0_i32 = arith.constant 0 : i32
    %0 = arith.cmpi eq, %arg1, %c0_i32 : i32
    %1 = arith.extui %0 : i1 to i32
    %c0_i32_0 = arith.constant 0 : i32
    %2 = arith.cmpi ne, %1, %c0_i32_0 : i32
    scf.if %2 {
      %cst_130 = arith.constant 0.000000e+00 : f32
      %226 = vector.broadcast %cst_130 : f32 to vector<8x128xf32>
      %c0_131 = arith.constant 0 : index
      %c0_132 = arith.constant 0 : index
      %227 = vector.load %arg7[%c0_131, %c0_132] : memref<8x128xf32, #tpu.memory_space<vmem>>, vector<8x128xf32>
      tpu.vector_store %arg7[%c0_131, %c0_132], %226 {strides = array<i32>} : memref<8x128xf32, #tpu.memory_space<vmem>>, vector<8x128xf32>,
    } else {
    }
    %c0 = arith.constant 0 : index
    %c0_1 = arith.constant 0 : index
    %c0_2 = arith.constant 0 : index
    %c0_3 = arith.constant 0 : index
    %3 = vector.load %arg2[%c0, %c0_1, %c0_2, %c0_3] : memref<1x3x32x128xf32, #tpu.memory_space<vmem>>, vector<1x1x32x128xf32>
    %4 = vector.shape_cast %3 : vector<1x1x32x128xf32> to vector<32x128xf32>
    %c0_4 = arith.constant 0 : index
    %c1 = arith.constant 1 : index
    %c0_5 = arith.constant 0 : index
    %c0_6 = arith.constant 0 : index
    %5 = vector.load %arg2[%c0_4, %c1, %c0_5, %c0_6] : memref<1x3x32x128xf32, #tpu.memory_space<vmem>>, vector<1x1x32x128xf32>
    %6 = vector.shape_cast %5 : vector<1x1x32x128xf32> to vector<32x128xf32>
    %c0_7 = arith.constant 0 : index
    %c2 = arith.constant 2 : index
    %c0_8 = arith.constant 0 : index
    %c0_9 = arith.constant 0 : index
    %7 = vector.load %arg2[%c0_7, %c2, %c0_8, %c0_9] : memref<1x3x32x128xf32, #tpu.memory_space<vmem>>, vector<1x1x32x128xf32>
    %8 = vector.shape_cast %7 : vector<1x1x32x128xf32> to vector<32x128xf32>
    %cst = arith.constant 0.216976374 : f32
    %9 = vector.broadcast %cst : f32 to vector<32x128xf32>
    %10 = arith.mulf %9, %4 : vector<32x128xf32>
    %cst_10 = arith.constant 0.188109711 : f32
    %11 = vector.broadcast %cst_10 : f32 to vector<32x128xf32>
    %12 = arith.mulf %11, %6 : vector<32x128xf32>
    %13 = arith.addf %10, %12 : vector<32x128xf32>
    %cst_11 = arith.constant 0.0949139148 : f32
    %14 = vector.broadcast %cst_11 : f32 to vector<32x128xf32>
    %15 = arith.mulf %14, %8 : vector<32x128xf32>
    %16 = arith.addf %13, %15 : vector<32x128xf32>
    %cst_12 = arith.constant 5.000000e-01 : f32
    %17 = vector.broadcast %cst_12 : f32 to vector<32x128xf32>
    %18 = arith.addf %16, %17 : vector<32x128xf32>
    %cst_13 = arith.constant 0.106335498 : f32
    %19 = vector.broadcast %cst_13 : f32 to vector<32x128xf32>
    %20 = arith.mulf %19, %4 : vector<32x128xf32>
    %cst_14 = arith.constant 3.575800e-01 : f32
    %21 = vector.broadcast %cst_14 : f32 to vector<32x128xf32>
    %22 = arith.mulf %21, %6 : vector<32x128xf32>
    %23 = arith.addf %20, %22 : vector<32x128xf32>
    %cst_15 = arith.constant 3.608450e-02 : f32
    %24 = vector.broadcast %cst_15 : f32 to vector<32x128xf32>
    %25 = arith.mulf %24, %8 : vector<32x128xf32>
    %26 = arith.addf %23, %25 : vector<32x128xf32>
    %cst_16 = arith.constant 5.000000e-01 : f32
    %27 = vector.broadcast %cst_16 : f32 to vector<32x128xf32>
    %28 = arith.addf %26, %27 : vector<32x128xf32>
    %cst_17 = arith.constant 0.00887895748 : f32
    %29 = vector.broadcast %cst_17 : f32 to vector<32x128xf32>
    %30 = arith.mulf %29, %4 : vector<32x128xf32>
    %cst_18 = arith.constant 0.0547382608 : f32
    %31 = vector.broadcast %cst_18 : f32 to vector<32x128xf32>
    %32 = arith.mulf %31, %6 : vector<32x128xf32>
    %33 = arith.addf %30, %32 : vector<32x128xf32>
    %cst_19 = arith.constant 0.436382771 : f32
    %34 = vector.broadcast %cst_19 : f32 to vector<32x128xf32>
    %35 = arith.mulf %34, %8 : vector<32x128xf32>
    %36 = arith.addf %33, %35 : vector<32x128xf32>
    %cst_20 = arith.constant 5.000000e-01 : f32
    %37 = vector.broadcast %cst_20 : f32 to vector<32x128xf32>
    %38 = arith.addf %36, %37 : vector<32x128xf32>
    %cst_21 = arith.constant 9.99999996E-13 : f32
    %39 = vector.broadcast %cst_21 : f32 to vector<32x128xf32>
    %40 = arith.maximumf %18, %39 : vector<32x128xf32>
    %cst_22 = arith.constant 0.333333343 : f32
    %41 = vector.broadcast %cst_22 : f32 to vector<32x128xf32>
    %42 = math.powf %40, %41 : vector<32x128xf32>
    %cst_23 = arith.constant 8.856000e-03 : f32
    %43 = vector.broadcast %cst_23 : f32 to vector<32x128xf32>
    %44 = arith.cmpf ogt, %18, %43 : vector<32x128xf32>
    %cst_24 = arith.constant 7.787000e+00 : f32
    %45 = vector.broadcast %cst_24 : f32 to vector<32x128xf32>
    %46 = arith.mulf %45, %18 : vector<32x128xf32>
    %cst_25 = arith.constant 1.379310e-01 : f32
    %47 = vector.broadcast %cst_25 : f32 to vector<32x128xf32>
    %48 = arith.addf %46, %47 : vector<32x128xf32>
    %49 = arith.select %44, %42, %48 : vector<32x128xi1>, vector<32x128xf32>
    %cst_26 = arith.constant 9.99999996E-13 : f32
    %50 = vector.broadcast %cst_26 : f32 to vector<32x128xf32>
    %51 = arith.maximumf %28, %50 : vector<32x128xf32>
    %cst_27 = arith.constant 0.333333343 : f32
    %52 = vector.broadcast %cst_27 : f32 to vector<32x128xf32>
    %53 = math.powf %51, %52 : vector<32x128xf32>
    %cst_28 = arith.constant 8.856000e-03 : f32
    %54 = vector.broadcast %cst_28 : f32 to vector<32x128xf32>
    %55 = arith.cmpf ogt, %28, %54 : vector<32x128xf32>
    %cst_29 = arith.constant 7.787000e+00 : f32
    %56 = vector.broadcast %cst_29 : f32 to vector<32x128xf32>
    %57 = arith.mulf %56, %28 : vector<32x128xf32>
    %cst_30 = arith.constant 1.379310e-01 : f32
    %58 = vector.broadcast %cst_30 : f32 to vector<32x128xf32>
    %59 = arith.addf %57, %58 : vector<32x128xf32>
    %60 = arith.select %55, %53, %59 : vector<32x128xi1>, vector<32x128xf32>
    %cst_31 = arith.constant 9.99999996E-13 : f32
    %61 = vector.broadcast %cst_31 : f32 to vector<32x128xf32>
    %62 = arith.maximumf %38, %61 : vector<32x128xf32>
    %cst_32 = arith.constant 0.333333343 : f32
    %63 = vector.broadcast %cst_32 : f32 to vector<32x128xf32>
    %64 = math.powf %62, %63 : vector<32x128xf32>
    %cst_33 = arith.constant 8.856000e-03 : f32
    %65 = vector.broadcast %cst_33 : f32 to vector<32x128xf32>
    %66 = arith.cmpf ogt, %38, %65 : vector<32x128xf32>
    %cst_34 = arith.constant 7.787000e+00 : f32
    %67 = vector.broadcast %cst_34 : f32 to vector<32x128xf32>
    %68 = arith.mulf %67, %38 : vector<32x128xf32>
    %cst_35 = arith.constant 1.379310e-01 : f32
    %69 = vector.broadcast %cst_35 : f32 to vector<32x128xf32>
    %70 = arith.addf %68, %69 : vector<32x128xf32>
    %71 = arith.select %66, %64, %70 : vector<32x128xi1>, vector<32x128xf32>
    %cst_36 = arith.constant 8.856000e-03 : f32
    %72 = vector.broadcast %cst_36 : f32 to vector<32x128xf32>
    %73 = arith.cmpf ogt, %28, %72 : vector<32x128xf32>
    %cst_37 = arith.constant 1.160000e+02 : f32
    %74 = vector.broadcast %cst_37 : f32 to vector<32x128xf32>
    %75 = arith.mulf %74, %60 : vector<32x128xf32>
    %cst_38 = arith.constant 1.600000e+01 : f32
    %76 = vector.broadcast %cst_38 : f32 to vector<32x128xf32>
    %77 = arith.subf %75, %76 : vector<32x128xf32>
    %cst_39 = arith.constant 903.299987 : f32
    %78 = vector.broadcast %cst_39 : f32 to vector<32x128xf32>
    %79 = arith.mulf %78, %28 : vector<32x128xf32>
    %80 = arith.select %73, %77, %79 : vector<32x128xi1>, vector<32x128xf32>
    %81 = arith.subf %49, %60 : vector<32x128xf32>
    %cst_40 = arith.constant 5.000000e+02 : f32
    %82 = vector.broadcast %cst_40 : f32 to vector<32x128xf32>
    %83 = arith.mulf %82, %81 : vector<32x128xf32>
    %84 = arith.subf %60, %71 : vector<32x128xf32>
    %cst_41 = arith.constant 2.000000e+02 : f32
    %85 = vector.broadcast %cst_41 : f32 to vector<32x128xf32>
    %86 = arith.mulf %85, %84 : vector<32x128xf32>
    %c0_42 = arith.constant 0 : index
    %c0_43 = arith.constant 0 : index
    %c0_44 = arith.constant 0 : index
    %87 = vector.load %arg4[%c0_42, %c0_43, %c0_44] : memref<1x32x128xi8, #tpu.memory_space<vmem>>, vector<1x32x128xi8>
    %88 = vector.shape_cast %87 : vector<1x32x128xi8> to vector<32x128xi8>
    %89 = arith.sitofp %88 : vector<32x128xi8> to vector<32x128xf32>
    %c0_45 = arith.constant 0 : index
    %c0_46 = arith.constant 0 : index
    %90 = vector.load %arg7[%c0_45, %c0_46] : memref<8x128xf32, #tpu.memory_space<vmem>>, vector<1x128xf32>
    %91 = arith.mulf %80, %89 : vector<32x128xf32>
    %cst_47 = arith.constant dense<0.000000e+00> : vector<128xf32>
    %92 = vector.multi_reduction <add>, %91, %cst_47 [0] : vector<32x128xf32> to vector<128xf32>
    %93 = vector.shape_cast %92 : vector<128xf32> to vector<1x128xf32>
    %94 = arith.addf %90, %93 : vector<1x128xf32>
    %c0_48 = arith.constant 0 : index
    %c0_49 = arith.constant 0 : index
    %95 = vector.load %arg7[%c0_48, %c0_49] : memref<8x128xf32, #tpu.memory_space<vmem>>, vector<1x128xf32>
    tpu.vector_store %arg7[%c0_48, %c0_49], %94 {strides = array<i32>} : memref<8x128xf32, #tpu.memory_space<vmem>>, vector<1x128xf32>,
    %c1_50 = arith.constant 1 : index
    %c0_51 = arith.constant 0 : index
    %96 = vector.load %arg7[%c1_50, %c0_51] : memref<8x128xf32, #tpu.memory_space<vmem>>, vector<1x128xf32>
    %97 = arith.mulf %83, %89 : vector<32x128xf32>
    %cst_52 = arith.constant dense<0.000000e+00> : vector<128xf32>
    %98 = vector.multi_reduction <add>, %97, %cst_52 [0] : vector<32x128xf32> to vector<128xf32>
    %99 = vector.shape_cast %98 : vector<128xf32> to vector<1x128xf32>
    %100 = arith.addf %96, %99 : vector<1x128xf32>
    %c1_53 = arith.constant 1 : index
    %c0_54 = arith.constant 0 : index
    %101 = vector.load %arg7[%c1_53, %c0_54] : memref<8x128xf32, #tpu.memory_space<vmem>>, vector<1x128xf32>
    tpu.vector_store %arg7[%c1_53, %c0_54], %100 {strides = array<i32>} : memref<8x128xf32, #tpu.memory_space<vmem>>, vector<1x128xf32>,
    %c2_55 = arith.constant 2 : index
    %c0_56 = arith.constant 0 : index
    %102 = vector.load %arg7[%c2_55, %c0_56] : memref<8x128xf32, #tpu.memory_space<vmem>>, vector<1x128xf32>
    %103 = arith.mulf %86, %89 : vector<32x128xf32>
    %cst_57 = arith.constant dense<0.000000e+00> : vector<128xf32>
    %104 = vector.multi_reduction <add>, %103, %cst_57 [0] : vector<32x128xf32> to vector<128xf32>
    %105 = vector.shape_cast %104 : vector<128xf32> to vector<1x128xf32>
    %106 = arith.addf %102, %105 : vector<1x128xf32>
    %c2_58 = arith.constant 2 : index
    %c0_59 = arith.constant 0 : index
    %107 = vector.load %arg7[%c2_58, %c0_59] : memref<8x128xf32, #tpu.memory_space<vmem>>, vector<1x128xf32>
    tpu.vector_store %arg7[%c2_58, %c0_59], %106 {strides = array<i32>} : memref<8x128xf32, #tpu.memory_space<vmem>>, vector<1x128xf32>,
    %c3 = arith.constant 3 : index
    %c0_60 = arith.constant 0 : index
    %108 = vector.load %arg7[%c3, %c0_60] : memref<8x128xf32, #tpu.memory_space<vmem>>, vector<1x128xf32>
    %cst_61 = arith.constant dense<0.000000e+00> : vector<128xf32>
    %109 = vector.multi_reduction <add>, %89, %cst_61 [0] : vector<32x128xf32> to vector<128xf32>
    %110 = vector.shape_cast %109 : vector<128xf32> to vector<1x128xf32>
    %111 = arith.addf %108, %110 : vector<1x128xf32>
    %c3_62 = arith.constant 3 : index
    %c0_63 = arith.constant 0 : index
    %112 = vector.load %arg7[%c3_62, %c0_63] : memref<8x128xf32, #tpu.memory_space<vmem>>, vector<1x128xf32>
    tpu.vector_store %arg7[%c3_62, %c0_63], %111 {strides = array<i32>} : memref<8x128xf32, #tpu.memory_space<vmem>>, vector<1x128xf32>,
    %c0_64 = arith.constant 0 : index
    %c0_65 = arith.constant 0 : index
    %c0_66 = arith.constant 0 : index
    %c0_67 = arith.constant 0 : index
    %113 = vector.load %arg3[%c0_64, %c0_65, %c0_66, %c0_67] : memref<1x3x32x128xf32, #tpu.memory_space<vmem>>, vector<1x1x32x128xf32>
    %114 = vector.shape_cast %113 : vector<1x1x32x128xf32> to vector<32x128xf32>
    %c0_68 = arith.constant 0 : index
    %c1_69 = arith.constant 1 : index
    %c0_70 = arith.constant 0 : index
    %c0_71 = arith.constant 0 : index
    %115 = vector.load %arg3[%c0_68, %c1_69, %c0_70, %c0_71] : memref<1x3x32x128xf32, #tpu.memory_space<vmem>>, vector<1x1x32x128xf32>
    %116 = vector.shape_cast %115 : vector<1x1x32x128xf32> to vector<32x128xf32>
    %c0_72 = arith.constant 0 : index
    %c2_73 = arith.constant 2 : index
    %c0_74 = arith.constant 0 : index
    %c0_75 = arith.constant 0 : index
    %117 = vector.load %arg3[%c0_72, %c2_73, %c0_74, %c0_75] : memref<1x3x32x128xf32, #tpu.memory_space<vmem>>, vector<1x1x32x128xf32>
    %118 = vector.shape_cast %117 : vector<1x1x32x128xf32> to vector<32x128xf32>
    %cst_76 = arith.constant 0.216976374 : f32
    %119 = vector.broadcast %cst_76 : f32 to vector<32x128xf32>
    %120 = arith.mulf %119, %114 : vector<32x128xf32>
    %cst_77 = arith.constant 0.188109711 : f32
    %121 = vector.broadcast %cst_77 : f32 to vector<32x128xf32>
    %122 = arith.mulf %121, %116 : vector<32x128xf32>
    %123 = arith.addf %120, %122 : vector<32x128xf32>
    %cst_78 = arith.constant 0.0949139148 : f32
    %124 = vector.broadcast %cst_78 : f32 to vector<32x128xf32>
    %125 = arith.mulf %124, %118 : vector<32x128xf32>
    %126 = arith.addf %123, %125 : vector<32x128xf32>
    %cst_79 = arith.constant 5.000000e-01 : f32
    %127 = vector.broadcast %cst_79 : f32 to vector<32x128xf32>
    %128 = arith.addf %126, %127 : vector<32x128xf32>
    %cst_80 = arith.constant 0.106335498 : f32
    %129 = vector.broadcast %cst_80 : f32 to vector<32x128xf32>
    %130 = arith.mulf %129, %114 : vector<32x128xf32>
    %cst_81 = arith.constant 3.575800e-01 : f32
    %131 = vector.broadcast %cst_81 : f32 to vector<32x128xf32>
    %132 = arith.mulf %131, %116 : vector<32x128xf32>
    %133 = arith.addf %130, %132 : vector<32x128xf32>
    %cst_82 = arith.constant 3.608450e-02 : f32
    %134 = vector.broadcast %cst_82 : f32 to vector<32x128xf32>
    %135 = arith.mulf %134, %118 : vector<32x128xf32>
    %136 = arith.addf %133, %135 : vector<32x128xf32>
    %cst_83 = arith.constant 5.000000e-01 : f32
    %137 = vector.broadcast %cst_83 : f32 to vector<32x128xf32>
    %138 = arith.addf %136, %137 : vector<32x128xf32>
    %cst_84 = arith.constant 0.00887895748 : f32
    %139 = vector.broadcast %cst_84 : f32 to vector<32x128xf32>
    %140 = arith.mulf %139, %114 : vector<32x128xf32>
    %cst_85 = arith.constant 0.0547382608 : f32
    %141 = vector.broadcast %cst_85 : f32 to vector<32x128xf32>
    %142 = arith.mulf %141, %116 : vector<32x128xf32>
    %143 = arith.addf %140, %142 : vector<32x128xf32>
    %cst_86 = arith.constant 0.436382771 : f32
    %144 = vector.broadcast %cst_86 : f32 to vector<32x128xf32>
    %145 = arith.mulf %144, %118 : vector<32x128xf32>
    %146 = arith.addf %143, %145 : vector<32x128xf32>
    %cst_87 = arith.constant 5.000000e-01 : f32
    %147 = vector.broadcast %cst_87 : f32 to vector<32x128xf32>
    %148 = arith.addf %146, %147 : vector<32x128xf32>
    %cst_88 = arith.constant 9.99999996E-13 : f32
    %149 = vector.broadcast %cst_88 : f32 to vector<32x128xf32>
    %150 = arith.maximumf %128, %149 : vector<32x128xf32>
    %cst_89 = arith.constant 0.333333343 : f32
    %151 = vector.broadcast %cst_89 : f32 to vector<32x128xf32>
    %152 = math.powf %150, %151 : vector<32x128xf32>
    %cst_90 = arith.constant 8.856000e-03 : f32
    %153 = vector.broadcast %cst_90 : f32 to vector<32x128xf32>
    %154 = arith.cmpf ogt, %128, %153 : vector<32x128xf32>
    %cst_91 = arith.constant 7.787000e+00 : f32
    %155 = vector.broadcast %cst_91 : f32 to vector<32x128xf32>
    %156 = arith.mulf %155, %128 : vector<32x128xf32>
    %cst_92 = arith.constant 1.379310e-01 : f32
    %157 = vector.broadcast %cst_92 : f32 to vector<32x128xf32>
    %158 = arith.addf %156, %157 : vector<32x128xf32>
    %159 = arith.select %154, %152, %158 : vector<32x128xi1>, vector<32x128xf32>
    %cst_93 = arith.constant 9.99999996E-13 : f32
    %160 = vector.broadcast %cst_93 : f32 to vector<32x128xf32>
    %161 = arith.maximumf %138, %160 : vector<32x128xf32>
    %cst_94 = arith.constant 0.333333343 : f32
    %162 = vector.broadcast %cst_94 : f32 to vector<32x128xf32>
    %163 = math.powf %161, %162 : vector<32x128xf32>
    %cst_95 = arith.constant 8.856000e-03 : f32
    %164 = vector.broadcast %cst_95 : f32 to vector<32x128xf32>
    %165 = arith.cmpf ogt, %138, %164 : vector<32x128xf32>
    %cst_96 = arith.constant 7.787000e+00 : f32
    %166 = vector.broadcast %cst_96 : f32 to vector<32x128xf32>
    %167 = arith.mulf %166, %138 : vector<32x128xf32>
    %cst_97 = arith.constant 1.379310e-01 : f32
    %168 = vector.broadcast %cst_97 : f32 to vector<32x128xf32>
    %169 = arith.addf %167, %168 : vector<32x128xf32>
    %170 = arith.select %165, %163, %169 : vector<32x128xi1>, vector<32x128xf32>
    %cst_98 = arith.constant 9.99999996E-13 : f32
    %171 = vector.broadcast %cst_98 : f32 to vector<32x128xf32>
    %172 = arith.maximumf %148, %171 : vector<32x128xf32>
    %cst_99 = arith.constant 0.333333343 : f32
    %173 = vector.broadcast %cst_99 : f32 to vector<32x128xf32>
    %174 = math.powf %172, %173 : vector<32x128xf32>
    %cst_100 = arith.constant 8.856000e-03 : f32
    %175 = vector.broadcast %cst_100 : f32 to vector<32x128xf32>
    %176 = arith.cmpf ogt, %148, %175 : vector<32x128xf32>
    %cst_101 = arith.constant 7.787000e+00 : f32
    %177 = vector.broadcast %cst_101 : f32 to vector<32x128xf32>
    %178 = arith.mulf %177, %148 : vector<32x128xf32>
    %cst_102 = arith.constant 1.379310e-01 : f32
    %179 = vector.broadcast %cst_102 : f32 to vector<32x128xf32>
    %180 = arith.addf %178, %179 : vector<32x128xf32>
    %181 = arith.select %176, %174, %180 : vector<32x128xi1>, vector<32x128xf32>
    %cst_103 = arith.constant 8.856000e-03 : f32
    %182 = vector.broadcast %cst_103 : f32 to vector<32x128xf32>
    %183 = arith.cmpf ogt, %138, %182 : vector<32x128xf32>
    %cst_104 = arith.constant 1.160000e+02 : f32
    %184 = vector.broadcast %cst_104 : f32 to vector<32x128xf32>
    %185 = arith.mulf %184, %170 : vector<32x128xf32>
    %cst_105 = arith.constant 1.600000e+01 : f32
    %186 = vector.broadcast %cst_105 : f32 to vector<32x128xf32>
    %187 = arith.subf %185, %186 : vector<32x128xf32>
    %cst_106 = arith.constant 903.299987 : f32
    %188 = vector.broadcast %cst_106 : f32 to vector<32x128xf32>
    %189 = arith.mulf %188, %138 : vector<32x128xf32>
    %190 = arith.select %183, %187, %189 : vector<32x128xi1>, vector<32x128xf32>
    %191 = arith.subf %159, %170 : vector<32x128xf32>
    %cst_107 = arith.constant 5.000000e+02 : f32
    %192 = vector.broadcast %cst_107 : f32 to vector<32x128xf32>
    %193 = arith.mulf %192, %191 : vector<32x128xf32>
    %194 = arith.subf %170, %181 : vector<32x128xf32>
    %cst_108 = arith.constant 2.000000e+02 : f32
    %195 = vector.broadcast %cst_108 : f32 to vector<32x128xf32>
    %196 = arith.mulf %195, %194 : vector<32x128xf32>
    %c0_109 = arith.constant 0 : index
    %c0_110 = arith.constant 0 : index
    %c0_111 = arith.constant 0 : index
    %197 = vector.load %arg5[%c0_109, %c0_110, %c0_111] : memref<1x32x128xi8, #tpu.memory_space<vmem>>, vector<1x32x128xi8>
    %198 = vector.shape_cast %197 : vector<1x32x128xi8> to vector<32x128xi8>
    %199 = arith.sitofp %198 : vector<32x128xi8> to vector<32x128xf32>
    %c4 = arith.constant 4 : index
    %c0_112 = arith.constant 0 : index
    %200 = vector.load %arg7[%c4, %c0_112] : memref<8x128xf32, #tpu.memory_space<vmem>>, vector<1x128xf32>
    %201 = arith.mulf %190, %199 : vector<32x128xf32>
    %cst_113 = arith.constant dense<0.000000e+00> : vector<128xf32>
    %202 = vector.multi_reduction <add>, %201, %cst_113 [0] : vector<32x128xf32> to vector<128xf32>
    %203 = vector.shape_cast %202 : vector<128xf32> to vector<1x128xf32>
    %204 = arith.addf %200, %203 : vector<1x128xf32>
    %c4_114 = arith.constant 4 : index
    %c0_115 = arith.constant 0 : index
    %205 = vector.load %arg7[%c4_114, %c0_115] : memref<8x128xf32, #tpu.memory_space<vmem>>, vector<1x128xf32>
    tpu.vector_store %arg7[%c4_114, %c0_115], %204 {strides = array<i32>} : memref<8x128xf32, #tpu.memory_space<vmem>>, vector<1x128xf32>,
    %c5 = arith.constant 5 : index
    %c0_116 = arith.constant 0 : index
    %206 = vector.load %arg7[%c5, %c0_116] : memref<8x128xf32, #tpu.memory_space<vmem>>, vector<1x128xf32>
    %207 = arith.mulf %193, %199 : vector<32x128xf32>
    %cst_117 = arith.constant dense<0.000000e+00> : vector<128xf32>
    %208 = vector.multi_reduction <add>, %207, %cst_117 [0] : vector<32x128xf32> to vector<128xf32>
    %209 = vector.shape_cast %208 : vector<128xf32> to vector<1x128xf32>
    %210 = arith.addf %206, %209 : vector<1x128xf32>
    %c5_118 = arith.constant 5 : index
    %c0_119 = arith.constant 0 : index
    %211 = vector.load %arg7[%c5_118, %c0_119] : memref<8x128xf32, #tpu.memory_space<vmem>>, vector<1x128xf32>
    tpu.vector_store %arg7[%c5_118, %c0_119], %210 {strides = array<i32>} : memref<8x128xf32, #tpu.memory_space<vmem>>, vector<1x128xf32>,
    %c6 = arith.constant 6 : index
    %c0_120 = arith.constant 0 : index
    %212 = vector.load %arg7[%c6, %c0_120] : memref<8x128xf32, #tpu.memory_space<vmem>>, vector<1x128xf32>
    %213 = arith.mulf %196, %199 : vector<32x128xf32>
    %cst_121 = arith.constant dense<0.000000e+00> : vector<128xf32>
    %214 = vector.multi_reduction <add>, %213, %cst_121 [0] : vector<32x128xf32> to vector<128xf32>
    %215 = vector.shape_cast %214 : vector<128xf32> to vector<1x128xf32>
    %216 = arith.addf %212, %215 : vector<1x128xf32>
    %c6_122 = arith.constant 6 : index
    %c0_123 = arith.constant 0 : index
    %217 = vector.load %arg7[%c6_122, %c0_123] : memref<8x128xf32, #tpu.memory_space<vmem>>, vector<1x128xf32>
    tpu.vector_store %arg7[%c6_122, %c0_123], %216 {strides = array<i32>} : memref<8x128xf32, #tpu.memory_space<vmem>>, vector<1x128xf32>,
    %c7 = arith.constant 7 : index
    %c0_124 = arith.constant 0 : index
    %218 = vector.load %arg7[%c7, %c0_124] : memref<8x128xf32, #tpu.memory_space<vmem>>, vector<1x128xf32>
    %cst_125 = arith.constant dense<0.000000e+00> : vector<128xf32>
    %219 = vector.multi_reduction <add>, %199, %cst_125 [0] : vector<32x128xf32> to vector<128xf32>
    %220 = vector.shape_cast %219 : vector<128xf32> to vector<1x128xf32>
    %221 = arith.addf %218, %220 : vector<1x128xf32>
    %c7_126 = arith.constant 7 : index
    %c0_127 = arith.constant 0 : index
    %222 = vector.load %arg7[%c7_126, %c0_127] : memref<8x128xf32, #tpu.memory_space<vmem>>, vector<1x128xf32>
    tpu.vector_store %arg7[%c7_126, %c0_127], %221 {strides = array<i32>} : memref<8x128xf32, #tpu.memory_space<vmem>>, vector<1x128xf32>,
    %c0_i32_128 = arith.constant 0 : i32
    %223 = arith.cmpi eq, %arg1, %c0_i32_128 : i32
    %224 = arith.extui %223 : i1 to i32
    %c0_i32_129 = arith.constant 0 : i32
    %225 = arith.cmpi ne, %224, %c0_i32_129 : i32
    scf.if %225 {
      %c0_130 = arith.constant 0 : index
      %c0_131 = arith.constant 0 : index
      %226 = vector.load %arg7[%c0_130, %c0_131] : memref<8x128xf32, #tpu.memory_space<vmem>>, vector<8x128xf32>
      %c0_132 = arith.constant 0 : index
      %c0_133 = arith.constant 0 : index
      %c0_134 = arith.constant 0 : index
      %227 = vector.load %arg6[%c0_132, %c0_133, %c0_134] : memref<1x8x128xf32, #tpu.memory_space<vmem>>, vector<1x8x128xf32>
      %228 = vector.shape_cast %227 : vector<1x8x128xf32> to vector<8x128xf32>
      %229 = vector.shape_cast %226 : vector<8x128xf32> to vector<1x8x128xf32>
      tpu.vector_store %arg6[%c0_132, %c0_133, %c0_134], %229 {strides = array<i32>} : memref<1x8x128xf32, #tpu.memory_space<vmem>>, vector<1x8x128xf32>,
    } else {
    }
    return
  }
  func.func @transform_0(%arg0: i32, %arg1: i32) -> (i32, i32, i32, i32) {
    %c0_i32 = arith.constant 0 : i32
    %c0_i32_0 = arith.constant 0 : i32
    %c0_i32_1 = arith.constant 0 : i32
    return %arg0, %c0_i32, %arg1, %c0_i32_0 : i32, i32, i32, i32
  }
  func.func @transform_1(%arg0: i32, %arg1: i32) -> (i32, i32, i32, i32) {
    %c0_i32 = arith.constant 0 : i32
    %c0_i32_0 = arith.constant 0 : i32
    %c0_i32_1 = arith.constant 0 : i32
    return %arg0, %c0_i32, %arg1, %c0_i32_0 : i32, i32, i32, i32
  }
  func.func @transform_2(%arg0: i32, %arg1: i32) -> (i32, i32, i32) {
    %c0_i32 = arith.constant 0 : i32
    %c0_i32_0 = arith.constant 0 : i32
    return %arg0, %arg1, %c0_i32 : i32, i32, i32
  }
  func.func @transform_3(%arg0: i32, %arg1: i32) -> (i32, i32, i32) {
    %c0_i32 = arith.constant 0 : i32
    %c0_i32_0 = arith.constant 0 : i32
    return %arg0, %arg1, %c0_i32 : i32, i32, i32
  }
  func.func @transform_4(%arg0: i32, %arg1: i32) -> (i32, i32, i32) {
    %c0_i32 = arith.constant 0 : i32
    %c0_i32_0 = arith.constant 0 : i32
    %c0_i32_1 = arith.constant 0 : i32
    return %arg0, %c0_i32, %c0_i32_0 : i32, i32, i32
  }
}

</mosaic_0001>

<llo_original>
// kernel: avg_lab_loss.1
$region0: #{avg_lab_loss.1}
  #allocation0 [shape = 'u32[]', space=smem, size = 0x4, offset = 0x4, fixed_abs, tag = 'smem constant byte address 0x4 - core index']
  #allocation1 [shape = 'u32[144,128]{1,0:T(1,128)}', space=vmem, size = 0x12000, scoped, tag = 'internal scratch']
  #allocation2 [shape = 'f32[8,128]{1,0:T(8,128)}', space=vmem, size = 0x1000, scoped, tag = 'scratch operand']
  %s0 = inlined_call_operand.vmem [shape: f32[2,3,32,128], index: 0, kind: input, shape index: {}]
  %s1 = inlined_call_operand.vmem [shape: f32[2,3,32,128], index: 1, kind: input, shape index: {}]
  %s2 = inlined_call_operand.vmem [shape: s8[2,32,128], index: 2, kind: input, shape index: {}]
  %s3 = inlined_call_operand.vmem [shape: s8[2,32,128], index: 3, kind: input, shape index: {}]
  %s4 = inlined_call_operand.vmem [shape: f32[2,8,128], index: 4, kind: output, shape index: {}]
  %s5 = sld [smem:[#allocation0]]
  $region57: #{avg_lab_loss.1} parent=0
    _
  %s7 = ssub.s32 1, %s5
  %s8 = scalar_select 0, %s7, %s5
  loop: start=0, step=1, limit=4
  $region2: #{avg_lab_loss.1} parent=0 // loop_pre_header
    _
  $region3: #{avg_lab_loss.1} parent=0 // loop_header
    %s10 = sphi 0, %s14
    %p11 = scmp.ge.s32.totalorder %s10, 4
    %s17 = sphi 0, %s29
    %s18 = sphi 0, %s25
    %s19 = sphi 0, %s17
    %s20 = sphi 0, %s18
    %s21 = sphi 0, %s19
    %s22 = sphi 0, %s20
    %s34 = sphi 0, %s36
    %s37 = sphi 0, %s34
    %s38 = sphi 0, %s37
    %s54 = sphi 0, %s38
    %s62 = sphi 0, %s64
    %s65 = sphi 0, %s62
    %s66 = sphi 0, %s65
    %s82 = sphi 0, %s66
    %s90 = sphi 0, %s92
    %s93 = sphi 0, %s90
    %s94 = sphi 0, %s93
    %s110 = sphi 0, %s94
    %s118 = sphi 0, %s120
    %s121 = sphi 0, %s118
    %s122 = sphi 0, %s121
    %s138 = sphi 0, %s122
    %s144 = sphi 0, %s146
    %s147 = sphi 0, %s144
    %s148 = sphi 0, %s147
    %s164 = sphi 0, %s148
  $region4: #{avg_lab_loss.1} parent=0 // loop_header_branch
    %13 = sbr.rel (%p11) target = $region8
  $region5: #{avg_lab_loss.1} parent=0 // loop_body
    %s15 = ssub.s32 %s10, 1
    %s16 = ssub.s32 %s10, 2
    %s23 = sadd.s32 1, %s18
    %p24 = scmp.ge.s32.totalorder %s23, 1
    %s25 = scalar_select %p24, 0, %s23
    %s26 = sadd.s32 1, %s17
    %s27 = scalar_select %p24, %s26, %s17
    %p28 = scmp.ge.s32.totalorder %s27, 2
    %s29 = scalar_select %p28, 0, %s27
    %s30 = ssub.s32 %s17, %s29
    %s31 = ssub.s32 %s18, %s25
    %s32 = sor.u32 %s30, %s31
    %p33 = scmp.eq.s32.totalorder %s32, 0
    %s35 = sadd.s32 %s34, 1
    %s36 = scalar_select %p33, %s34, %s35
    %p39 = pneg %p33
    %p40 = scmp.eq.s32.totalorder %s10, 1
    %p41 = por %p39, %p40
    %p42 = scmp.ne.s32.totalorder %s34, %s37
    %p43 = scmp.eq.s32.totalorder %s10, 0
    %p44 = por %p42, %p43
    %p45 = scmp.ne.s32.totalorder %s34, %s37
    %p46 = scmp.eq.s32.totalorder %s15, 1
    %p47 = por %p45, %p46
    %p48 = scmp.ne.s32.totalorder %s37, %s38
    %p49 = scmp.eq.s32.totalorder %s15, 0
    %p50 = por %p48, %p49
    %p51 = scmp.ne.s32.totalorder %s37, %s38
    %p52 = scmp.eq.s32.totalorder %s16, 1
    %p53 = por %p51, %p52
    %p55 = scmp.ne.s32.totalorder %s38, %s54
    %p56 = scmp.eq.s32.totalorder %s16, 0
    %p57 = por %p55, %p56
    %s58 = ssub.s32 %s17, %s29
    %s59 = ssub.s32 %s18, %s25
    %s60 = sor.u32 %s58, %s59
    %p61 = scmp.eq.s32.totalorder %s60, 0
    %s63 = sadd.s32 %s62, 1
    %s64 = scalar_select %p61, %s62, %s63
    %p67 = pneg %p61
    %p68 = scmp.eq.s32.totalorder %s10, 1
    %p69 = por %p67, %p68
    %p70 = scmp.ne.s32.totalorder %s62, %s65
    %p71 = scmp.eq.s32.totalorder %s10, 0
    %p72 = por %p70, %p71
    %p73 = scmp.ne.s32.totalorder %s62, %s65
    %p74 = scmp.eq.s32.totalorder %s15, 1
    %p75 = por %p73, %p74
    %p76 = scmp.ne.s32.totalorder %s65, %s66
    %p77 = scmp.eq.s32.totalorder %s15, 0
    %p78 = por %p76, %p77
    %p79 = scmp.ne.s32.totalorder %s65, %s66
    %p80 = scmp.eq.s32.totalorder %s16, 1
    %p81 = por %p79, %p80
    %p83 = scmp.ne.s32.totalorder %s66, %s82
    %p84 = scmp.eq.s32.totalorder %s16, 0
    %p85 = por %p83, %p84
    %s86 = ssub.s32 %s17, %s29
    %s87 = ssub.s32 %s18, %s25
    %s88 = sor.u32 %s86, %s87
    %p89 = scmp.eq.s32.totalorder %s88, 0
    %s91 = sadd.s32 %s90, 1
    %s92 = scalar_select %p89, %s90, %s91
    %p95 = pneg %p89
    %p96 = scmp.eq.s32.totalorder %s10, 1
    %p97 = por %p95, %p96
    %p98 = scmp.ne.s32.totalorder %s90, %s93
    %p99 = scmp.eq.s32.totalorder %s10, 0
    %p100 = por %p98, %p99
    %p101 = scmp.ne.s32.totalorder %s90, %s93
    %p102 = scmp.eq.s32.totalorder %s15, 1
    %p103 = por %p101, %p102
    %p104 = scmp.ne.s32.totalorder %s93, %s94
    %p105 = scmp.eq.s32.totalorder %s15, 0
    %p106 = por %p104, %p105
    %p107 = scmp.ne.s32.totalorder %s93, %s94
    %p108 = scmp.eq.s32.totalorder %s16, 1
    %p109 = por %p107, %p108
    %p111 = scmp.ne.s32.totalorder %s94, %s110
    %p112 = scmp.eq.s32.totalorder %s16, 0
    %p113 = por %p111, %p112
    %s114 = ssub.s32 %s17, %s29
    %s115 = ssub.s32 %s18, %s25
    %s116 = sor.u32 %s114, %s115
    %p117 = scmp.eq.s32.totalorder %s116, 0
    %s119 = sadd.s32 %s118, 1
    %s120 = scalar_select %p117, %s118, %s119
    %p123 = pneg %p117
    %p124 = scmp.eq.s32.totalorder %s10, 1
    %p125 = por %p123, %p124
    %p126 = scmp.ne.s32.totalorder %s118, %s121
    %p127 = scmp.eq.s32.totalorder %s10, 0
    %p128 = por %p126, %p127
    %p129 = scmp.ne.s32.totalorder %s118, %s121
    %p130 = scmp.eq.s32.totalorder %s15, 1
    %p131 = por %p129, %p130
    %p132 = scmp.ne.s32.totalorder %s121, %s122
    %p133 = scmp.eq.s32.totalorder %s15, 0
    %p134 = por %p132, %p133
    %p135 = scmp.ne.s32.totalorder %s121, %s122
    %p136 = scmp.eq.s32.totalorder %s16, 1
    %p137 = por %p135, %p136
    %p139 = scmp.ne.s32.totalorder %s122, %s138
    %p140 = scmp.eq.s32.totalorder %s16, 0
    %p141 = por %p139, %p140
    %s142 = ssub.s32 %s17, %s29
    %p143 = scmp.eq.s32.totalorder %s142, 0
    %s145 = sadd.s32 %s144, 1
    %s146 = scalar_select %p143, %s144, %s145
    %p149 = pneg %p143
    %p150 = scmp.eq.s32.totalorder %s10, 1
    %p151 = por %p149, %p150
    %p152 = scmp.ne.s32.totalorder %s144, %s147
    %p153 = scmp.eq.s32.totalorder %s10, 0
    %p154 = por %p152, %p153
    %p155 = scmp.ne.s32.totalorder %s144, %s147
    %p156 = scmp.eq.s32.totalorder %s15, 1
    %p157 = por %p155, %p156
    %p158 = scmp.ne.s32.totalorder %s147, %s148
    %p159 = scmp.eq.s32.totalorder %s15, 0
    %p160 = por %p158, %p159
    %p161 = scmp.ne.s32.totalorder %s147, %s148
    %p162 = scmp.eq.s32.totalorder %s16, 1
    %p163 = por %p161, %p162
    %p165 = scmp.ne.s32.totalorder %s148, %s164
    %p166 = scmp.eq.s32.totalorder %s16, 0
    %p167 = por %p165, %p166
    %p168 = scmp.le.s32.totalorder 1, %s10
    %p169 = scmp.lt.s32.totalorder %s10, 3
    %p170 = pnand %p168, %p169
    %p171 = pneg %p170
    // Predicated region
    $region9: #{avg_lab_loss.1} parent=5 // pred_check
      _
    $region10: #{avg_lab_loss.1} parent=5 // pred_check_branch
      %173 = sbr.rel (%p170) target = $region12
    $region11: #{avg_lab_loss.1} parent=5 // pred_region
      %s174 = ssub.s32 %s10, 1
    $region12: #{avg_lab_loss.1} parent=5 // pred_fallthru
      _
    %p175 = scmp.lt.s32.totalorder %s10, 2
    // Predicated region
    $region13: #{avg_lab_loss.1} parent=5 // pred_check
      %p176 = pneg %p175
    $region14: #{avg_lab_loss.1} parent=5 // pred_check_branch
      %178 = sbr.rel (%p176) target = $region16
    $region15: #{avg_lab_loss.1} parent=5 // pred_region
      // Predicated region
      $region17: #{avg_lab_loss.1} parent=15 // pred_check
        %p179 = pneg %p44
      $region18: #{avg_lab_loss.1} parent=15 // pred_check_branch
        %181 = sbr.rel (%p179) target = $region20
      $region19: #{avg_lab_loss.1} parent=15 // pred_region
        %s182 = smul.u32 4, %s18
        %p183 = scmp.lt.s32.totalorder %s17, 1
        %s184 = scalar_select %p183, %s17, 1
        %p185 = scmp.lt.s32.totalorder %s182, 3
        %s186 = scalar_select %p185, %s182, 3
        %s187 = smul.addr %s184, 12
        %s188 = sadd.s32 %s186, %s187
        %s189 = smul.addr %s188, 8
        %s190 = scalar_lea.vmem %s0, %s189
        %s191 = smul.u32 4, %s18
      $region20: #{avg_lab_loss.1} parent=15 // pred_fallthru
        _
      // Predicated region
      $region21: #{avg_lab_loss.1} parent=15 // pred_check
        %p192 = pneg %p72
      $region22: #{avg_lab_loss.1} parent=15 // pred_check_branch
        %194 = sbr.rel (%p192) target = $region24
      $region23: #{avg_lab_loss.1} parent=15 // pred_region
        %s195 = smul.u32 4, %s18
        %p196 = scmp.lt.s32.totalorder %s17, 1
        %s197 = scalar_select %p196, %s17, 1
        %p198 = scmp.lt.s32.totalorder %s195, 3
        %s199 = scalar_select %p198, %s195, 3
        %s200 = smul.addr %s197, 12
        %s201 = sadd.s32 %s199, %s200
        %s202 = smul.addr %s201, 8
        %s203 = scalar_lea.vmem %s1, %s202
        %s204 = smul.u32 4, %s18
      $region24: #{avg_lab_loss.1} parent=15 // pred_fallthru
        _
      // Predicated region
      $region25: #{avg_lab_loss.1} parent=15 // pred_check
        %p205 = pneg %p100
      $region26: #{avg_lab_loss.1} parent=15 // pred_check_branch
        %207 = sbr.rel (%p205) target = $region28
      $region27: #{avg_lab_loss.1} parent=15 // pred_region
        %p208 = scmp.lt.s32.totalorder %s17, 1
        %s209 = scalar_select %p208, %s17, 1
        %p210 = scmp.lt.s32.totalorder %s18, 0
        %s211 = scalar_select %p210, %s18, 0
        %s212 = sadd.s32 %s211, %s209
        %s213 = smul.addr %s212, 8
        %s214 = scalar_lea.vmem %s2, %s213
      $region28: #{avg_lab_loss.1} parent=15 // pred_fallthru
        _
      // Predicated region
      $region29: #{avg_lab_loss.1} parent=15 // pred_check
        %p215 = pneg %p128
      $region30: #{avg_lab_loss.1} parent=15 // pred_check_branch
        %217 = sbr.rel (%p215) target = $region32
      $region31: #{avg_lab_loss.1} parent=15 // pred_region
        %p218 = scmp.lt.s32.totalorder %s17, 1
        %s219 = scalar_select %p218, %s17, 1
        %p220 = scmp.lt.s32.totalorder %s18, 0
        %s221 = scalar_select %p220, %s18, 0
        %s222 = sadd.s32 %s221, %s219
        %s223 = smul.addr %s222, 8
        %s224 = scalar_lea.vmem %s3, %s223
      $region32: #{avg_lab_loss.1} parent=15 // pred_fallthru
        _
    $region16: #{avg_lab_loss.1} parent=5 // pred_fallthru
      _
    %p225 = scmp.le.s32.totalorder 1, %s10
    %p226 = scmp.lt.s32.totalorder %s10, 3
    %p227 = pnand %p225, %p226
    %p228 = pneg %p227
    // Predicated region
    $region33: #{avg_lab_loss.1} parent=5 // pred_check
      _
    $region34: #{avg_lab_loss.1} parent=5 // pred_check_branch
      %230 = sbr.rel (%p227) target = $region36
    $region35: #{avg_lab_loss.1} parent=5 // pred_region
      %s231 = ssub.s32 %s10, 1
      %s232 = smul.u32 4, %s20
      %p233 = scmp.lt.s32.totalorder %s19, 1
      %s234 = scalar_select %p233, %s19, 1
      %p235 = scmp.lt.s32.totalorder %s232, 3
      %s236 = scalar_select %p235, %s232, 3
      %s237 = smul.addr %s234, 12
      %s238 = sadd.s32 %s236, %s237
      %s239 = smul.addr %s238, 8
      %s240 = scalar_lea.vmem %s0, %s239
      %p241 = pneg %p50
      %p242 = pneg %p47
      %s243 = smul.u32 4, %s20
      %p244 = scmp.lt.s32.totalorder %s19, 1
      %s245 = scalar_select %p244, %s19, 1
      %p246 = scmp.lt.s32.totalorder %s243, 3
      %s247 = scalar_select %p246, %s243, 3
      %s248 = smul.addr %s245, 12
      %s249 = sadd.s32 %s247, %s248
      %s250 = smul.addr %s249, 8
      %s251 = scalar_lea.vmem %s1, %s250
      %p252 = pneg %p78
      %p253 = pneg %p75
      %p254 = scmp.lt.s32.totalorder %s19, 1
      %s255 = scalar_select %p254, %s19, 1
      %p256 = scmp.lt.s32.totalorder %s20, 0
      %s257 = scalar_select %p256, %s20, 0
      %s258 = sadd.s32 %s257, %s255
      %s259 = smul.addr %s258, 8
      %s260 = scalar_lea.vmem %s2, %s259
      %p261 = pneg %p106
      %p262 = pneg %p103
      %p263 = scmp.lt.s32.totalorder %s19, 1
      %s264 = scalar_select %p263, %s19, 1
      %p265 = scmp.lt.s32.totalorder %s20, 0
      %s266 = scalar_select %p265, %s20, 0
      %s267 = sadd.s32 %s266, %s264
      %s268 = smul.addr %s267, 8
      %s269 = scalar_lea.vmem %s3, %s268
      %p270 = pneg %p134
      %p271 = pneg %p131
      %p272 = pneg %p160
      %p273 = pneg %p157
      %p274 = scmp.lt.s32.totalorder %s19, 1
      %s275 = scalar_select %p274, %s19, 1
      %s276 = smul.addr %s275, 8
      %s277 = scalar_lea.vmem %s4, %s276
      %s278 = smul.u32 4, %s20
      %p279 = scmp.lt.s32.totalorder %s19, 1
      %s280 = scalar_select %p279, %s19, 1
      %p281 = scmp.lt.s32.totalorder %s278, 3
      %s282 = scalar_select %p281, %s278, 3
      %s283 = smul.addr %s280, 12
      %s284 = sadd.s32 %s282, %s283
      %s285 = smul.addr %s284, 8
      %s286 = scalar_lea.vmem %s0, %s285
      %s287 = smul.u32 4, %s20
      %s288 = smul.u32 4, %s20
      %p289 = scmp.lt.s32.totalorder %s19, 1
      %s290 = scalar_select %p289, %s19, 1
      %p291 = scmp.lt.s32.totalorder %s288, 3
      %s292 = scalar_select %p291, %s288, 3
      %s293 = smul.addr %s290, 12
      %s294 = sadd.s32 %s292, %s293
      %s295 = smul.addr %s294, 8
      %s296 = scalar_lea.vmem %s1, %s295
      %s297 = smul.u32 4, %s20
      %p298 = scmp.lt.s32.totalorder %s19, 1
      %s299 = scalar_select %p298, %s19, 1
      %p300 = scmp.lt.s32.totalorder %s20, 0
      %s301 = scalar_select %p300, %s20, 0
      %s302 = sadd.s32 %s301, %s299
      %s303 = smul.addr %s302, 8
      %s304 = scalar_lea.vmem %s2, %s303
      %p305 = scmp.lt.s32.totalorder %s19, 1
      %s306 = scalar_select %p305, %s19, 1
      %p307 = scmp.lt.s32.totalorder %s20, 0
      %s308 = scalar_select %p307, %s20, 0
      %s309 = sadd.s32 %s308, %s306
      %s310 = smul.addr %s309, 8
      %s311 = scalar_lea.vmem %s3, %s310
      %p312 = scmp.lt.s32.totalorder %s19, 1
      %s313 = scalar_select %p312, %s19, 1
      %s314 = smul.addr %s313, 8
      %s315 = scalar_lea.vmem %s4, %s314
      %p316 = scmp.eq.s32.totalorder %s20, 0
      // Predicated region
      $region37: #{avg_lab_loss.1} parent=35 // pred_check
        %p317 = pneg %p316
      $region38: #{avg_lab_loss.1} parent=35 // pred_check_branch
        %319 = sbr.rel (%p317) target = $region40
      $region39: #{avg_lab_loss.1} parent=35 // pred_region
        %320 = vst [vmem:[#allocation2] sm:$0xff] 0.0
      $region40: #{avg_lab_loss.1} parent=35 // pred_fallthru
        _
      %v321 = vld [vmem:[%s286] sm:$0xff]
      %v322 = vld [vmem:[%s286 + $0x8] sm:$0xff]
      %v323 = vld [vmem:[%s286 + $0x10] sm:$0xff]
      %v324 = vld [vmem:[%s286 + $0x18] sm:$0xff]
      %s325 = scalar_lea.vmem %s286, 32
      %v326 = vld [vmem:[%s325] sm:$0xff]
      %v327 = vld [vmem:[%s325 + $0x8] sm:$0xff]
      %v328 = vld [vmem:[%s325 + $0x10] sm:$0xff]
      %v329 = vld [vmem:[%s325 + $0x18] sm:$0xff]
      %s330 = scalar_lea.vmem %s286, 64
      %v331 = vld [vmem:[%s330] sm:$0xff]
      %v332 = vld [vmem:[%s330 + $0x8] sm:$0xff]
      %v333 = vld [vmem:[%s330 + $0x10] sm:$0xff]
      %v334 = vld [vmem:[%s330 + $0x18] sm:$0xff]
      %v335 = vmul.f32 %v321, 0.21697637
      %v336 = vmul.f32 %v322, 0.21697637
      %v337 = vmul.f32 %v323, 0.21697637
      %v338 = vmul.f32 %v324, 0.21697637
      %v339 = vmul.f32 %v326, 0.18810971
      %v340 = vmul.f32 %v327, 0.18810971
      %v341 = vmul.f32 %v328, 0.18810971
      %v342 = vmul.f32 %v329, 0.18810971
      %v343 = vadd.f32 %v335, %v339
      %v344 = vadd.f32 %v336, %v340
      %v345 = vadd.f32 %v337, %v341
      %v346 = vadd.f32 %v338, %v342
      %v347 = vmul.f32 %v331, 0.094913915
      %v348 = vmul.f32 %v332, 0.094913915
      %v349 = vmul.f32 %v333, 0.094913915
      %v350 = vmul.f32 %v334, 0.094913915
      %v351 = vadd.f32 %v343, %v347
      %v352 = vadd.f32 %v344, %v348
      %v353 = vadd.f32 %v345, %v349
      %v354 = vadd.f32 %v346, %v350
      %v355 = vadd.f32 %v351, 0.5
      %v356 = vadd.f32 %v352, 0.5
      %v357 = vadd.f32 %v353, 0.5
      %v358 = vadd.f32 %v354, 0.5
      %v359 = vmul.f32 %v321, 0.1063355
      %v360 = vmul.f32 %v322, 0.1063355
      %v361 = vmul.f32 %v323, 0.1063355
      %v362 = vmul.f32 %v324, 0.1063355
      %v363 = vmul.f32 %v326, 0.35758
      %v364 = vmul.f32 %v327, 0.35758
      %v365 = vmul.f32 %v328, 0.35758
      %v366 = vmul.f32 %v329, 0.35758
      %v367 = vadd.f32 %v359, %v363
      %v368 = vadd.f32 %v360, %v364
      %v369 = vadd.f32 %v361, %v365
      %v370 = vadd.f32 %v362, %v366
      %v371 = vmul.f32 %v331, 0.0360845
      %v372 = vmul.f32 %v332, 0.0360845
      %v373 = vmul.f32 %v333, 0.0360845
      %v374 = vmul.f32 %v334, 0.0360845
      %v375 = vadd.f32 %v367, %v371
      %v376 = vadd.f32 %v368, %v372
      %v377 = vadd.f32 %v369, %v373
      %v378 = vadd.f32 %v370, %v374
      %v379 = vadd.f32 %v375, 0.5
      %v380 = vadd.f32 %v376, 0.5
      %v381 = vadd.f32 %v377, 0.5
      %v382 = vadd.f32 %v378, 0.5
      %v383 = vmul.f32 %v321, 0.0088789575
      %v384 = vmul.f32 %v322, 0.0088789575
      %v385 = vmul.f32 %v323, 0.0088789575
      %v386 = vmul.f32 %v324, 0.0088789575
      %v387 = vmul.f32 %v326, 0.05473826
      %v388 = vmul.f32 %v327, 0.05473826
      %v389 = vmul.f32 %v328, 0.05473826
      %v390 = vmul.f32 %v329, 0.05473826
      %v391 = vadd.f32 %v383, %v387
      %v392 = vadd.f32 %v384, %v388
      %v393 = vadd.f32 %v385, %v389
      %v394 = vadd.f32 %v386, %v390
      %v395 = vmul.f32 %v331, 0.43638277
      %v396 = vmul.f32 %v332, 0.43638277
      %v397 = vmul.f32 %v333, 0.43638277
      %v398 = vmul.f32 %v334, 0.43638277
      %v399 = vadd.f32 %v391, %v395
      %v400 = vadd.f32 %v392, %v396
      %v401 = vadd.f32 %v393, %v397
      %v402 = vadd.f32 %v394, %v398
      %v403 = vadd.f32 %v399, 0.5
      %v404 = vadd.f32 %v400, 0.5
      %v405 = vadd.f32 %v401, 0.5
      %v406 = vadd.f32 %v402, 0.5
      %v407 = vmax.f32 %v355, 1e-12
      %v408 = vmax.f32 %v356, 1e-12
      %v409 = vmax.f32 %v357, 1e-12
      %v410 = vmax.f32 %v358, 1e-12
      %v411 = vpow.f32 %v407, 0.33333334
      %v412 = vpow.f32 %v408, 0.33333334
      %v413 = vpow.f32 %v409, 0.33333334
      %v414 = vpow.f32 %v410, 0.33333334
      %vm415 = vcmp.gt.f32.partialorder %v355, 0.008856
      %vm416 = vcmp.gt.f32.partialorder %v356, 0.008856
      %vm417 = vcmp.gt.f32.partialorder %v357, 0.008856
      %vm418 = vcmp.gt.f32.partialorder %v358, 0.008856
      %v419 = vmul.f32 %v355, 7.787
      %v420 = vmul.f32 %v356, 7.787
      %v421 = vmul.f32 %v357, 7.787
      %v422 = vmul.f32 %v358, 7.787
      %v423 = vadd.f32 %v419, 0.137931
      %v424 = vadd.f32 %v420, 0.137931
      %v425 = vadd.f32 %v421, 0.137931
      %v426 = vadd.f32 %v422, 0.137931
      %v427 = vsel %vm415, %v411, %v423
      %v428 = vsel %vm416, %v412, %v424
      %v429 = vsel %vm417, %v413, %v425
      %v430 = vsel %vm418, %v414, %v426
      %v431 = vmax.f32 %v379, 1e-12
      %v432 = vmax.f32 %v380, 1e-12
      %v433 = vmax.f32 %v381, 1e-12
      %v434 = vmax.f32 %v382, 1e-12
      %v435 = vpow.f32 %v431, 0.33333334
      %v436 = vpow.f32 %v432, 0.33333334
      %v437 = vpow.f32 %v433, 0.33333334
      %v438 = vpow.f32 %v434, 0.33333334
      %vm439 = vcmp.gt.f32.partialorder %v379, 0.008856
      %vm440 = vcmp.gt.f32.partialorder %v380, 0.008856
      %vm441 = vcmp.gt.f32.partialorder %v381, 0.008856
      %vm442 = vcmp.gt.f32.partialorder %v382, 0.008856
      %v443 = vmul.f32 %v379, 7.787
      %v444 = vmul.f32 %v380, 7.787
      %v445 = vmul.f32 %v381, 7.787
      %v446 = vmul.f32 %v382, 7.787
      %v447 = vadd.f32 %v443, 0.137931
      %v448 = vadd.f32 %v444, 0.137931
      %v449 = vadd.f32 %v445, 0.137931
      %v450 = vadd.f32 %v446, 0.137931
      %v451 = vsel %vm439, %v435, %v447
      %v452 = vsel %vm440, %v436, %v448
      %v453 = vsel %vm441, %v437, %v449
      %v454 = vsel %vm442, %v438, %v450
      %v455 = vmax.f32 %v403, 1e-12
      %v456 = vmax.f32 %v404, 1e-12
      %v457 = vmax.f32 %v405, 1e-12
      %v458 = vmax.f32 %v406, 1e-12
      %v459 = vpow.f32 %v455, 0.33333334
      %v460 = vpow.f32 %v456, 0.33333334
      %v461 = vpow.f32 %v457, 0.33333334
      %v462 = vpow.f32 %v458, 0.33333334
      %vm463 = vcmp.gt.f32.partialorder %v403, 0.008856
      %vm464 = vcmp.gt.f32.partialorder %v404, 0.008856
      %vm465 = vcmp.gt.f32.partialorder %v405, 0.008856
      %vm466 = vcmp.gt.f32.partialorder %v406, 0.008856
      %v467 = vmul.f32 %v403, 7.787
      %v468 = vmul.f32 %v404, 7.787
      %v469 = vmul.f32 %v405, 7.787
      %v470 = vmul.f32 %v406, 7.787
      %v471 = vadd.f32 %v467, 0.137931
      %v472 = vadd.f32 %v468, 0.137931
      %v473 = vadd.f32 %v469, 0.137931
      %v474 = vadd.f32 %v470, 0.137931
      %v475 = vsel %vm463, %v459, %v471
      %v476 = vsel %vm464, %v460, %v472
      %v477 = vsel %vm465, %v461, %v473
      %v478 = vsel %vm466, %v462, %v474
      %v479 = vmul.f32 %v451, 116.0
      %v480 = vmul.f32 %v452, 116.0
      %v481 = vmul.f32 %v453, 116.0
      %v482 = vmul.f32 %v454, 116.0
      %v483 = vsub.f32 %v479, 16.0
      %v484 = vsub.f32 %v480, 16.0
      %v485 = vsub.f32 %v481, 16.0
      %v486 = vsub.f32 %v482, 16.0
      %v487 = vmul.f32 %v379, 903.3
      %v488 = vmul.f32 %v380, 903.3
      %v489 = vmul.f32 %v381, 903.3
      %v490 = vmul.f32 %v382, 903.3
      %v491 = vsel %vm439, %v483, %v487
      %v492 = vsel %vm440, %v484, %v488
      %v493 = vsel %vm441, %v485, %v489
      %v494 = vsel %vm442, %v486, %v490
      %v495 = vsub.f32 %v427, %v451
      %v496 = vsub.f32 %v428, %v452
      %v497 = vsub.f32 %v429, %v453
      %v498 = vsub.f32 %v430, %v454
      %v499 = vmul.f32 %v495, 500.0
      %v500 = vmul.f32 %v496, 500.0
      %v501 = vmul.f32 %v497, 500.0
      %v502 = vmul.f32 %v498, 500.0
      %v503 = vsub.f32 %v451, %v475
      %v504 = vsub.f32 %v452, %v476
      %v505 = vsub.f32 %v453, %v477
      %v506 = vsub.f32 %v454, %v478
      %v507 = vmul.f32 %v503, 200.0
      %v508 = vmul.f32 %v504, 200.0
      %v509 = vmul.f32 %v505, 200.0
      %v510 = vmul.f32 %v506, 200.0
      %v511 = vld [vmem:[%s304] sm:$0xff]
      %v512 = vunpack.c.0.s8 %v511
      %v513 = vunpack.c.1.s8 %v511
      %v514 = vunpack.c.2.s8 %v511
      %v515 = vunpack.c.3.s8 %v511
      %v516 = vcvt.s32.f32 %v512
      %v517 = vcvt.s32.f32 %v513
      %v518 = vcvt.s32.f32 %v514
      %v519 = vcvt.s32.f32 %v515
      %v520 = vld [vmem:[#allocation2] sm:$0x1]
      %v521 = vmul.f32 %v491, %v516
      %v522 = vmul.f32 %v492, %v517
      %v523 = vmul.f32 %v493, %v518
      %v524 = vmul.f32 %v494, %v519
      %v525 = vadd.f32 %v521, %v522
      %v526 = vadd.f32 %v525, %v523
      %v527 = vadd.f32 %v526, %v524
      %v528 = vrot.slane %v527, 4
      %v529 = vadd.f32 %v527, %v528
      %v530 = vrot.slane %v529, 2
      %v531 = vadd.f32 %v529, %v530
      %v532 = vrot.slane %v531, 1
      %v533 = vadd.f32 %v531, %v532
      %v534 = vadd.f32 %v520, %v533
      %535 = vst [vmem:[#allocation2] sm:$0x1] %v534
      %v536 = vld [vmem:[#allocation2 + $0x1] sm:$0x1]
      %v537 = vmul.f32 %v499, %v516
      %v538 = vmul.f32 %v500, %v517
      %v539 = vmul.f32 %v501, %v518
      %v540 = vmul.f32 %v502, %v519
      %v541 = vadd.f32 %v537, %v538
      %v542 = vadd.f32 %v541, %v539
      %v543 = vadd.f32 %v542, %v540
      %v544 = vrot.slane %v543, 4
      %v545 = vadd.f32 %v543, %v544
      %v546 = vrot.slane %v545, 2
      %v547 = vadd.f32 %v545, %v546
      %v548 = vrot.slane %v547, 1
      %v549 = vadd.f32 %v547, %v548
      %v550 = vadd.f32 %v536, %v549
      %551 = vst [vmem:[#allocation2 + $0x1] sm:$0x1] %v550
      %v552 = vld [vmem:[#allocation2 + $0x2] sm:$0x1]
      %v553 = vmul.f32 %v507, %v516
      %v554 = vmul.f32 %v508, %v517
      %v555 = vmul.f32 %v509, %v518
      %v556 = vmul.f32 %v510, %v519
      %v557 = vadd.f32 %v553, %v554
      %v558 = vadd.f32 %v557, %v555
      %v559 = vadd.f32 %v558, %v556
      %v560 = vrot.slane %v559, 4
      %v561 = vadd.f32 %v559, %v560
      %v562 = vrot.slane %v561, 2
      %v563 = vadd.f32 %v561, %v562
      %v564 = vrot.slane %v563, 1
      %v565 = vadd.f32 %v563, %v564
      %v566 = vadd.f32 %v552, %v565
      %567 = vst [vmem:[#allocation2 + $0x2] sm:$0x1] %v566
      %v568 = vld [vmem:[#allocation2 + $0x3] sm:$0x1]
      %v569 = vadd.f32 %v516, %v517
      %v570 = vadd.f32 %v569, %v518
      %v571 = vadd.f32 %v570, %v519
      %v572 = vrot.slane %v571, 4
      %v573 = vadd.f32 %v571, %v572
      %v574 = vrot.slane %v573, 2
      %v575 = vadd.f32 %v573, %v574
      %v576 = vrot.slane %v575, 1
      %v577 = vadd.f32 %v575, %v576
      %v578 = vadd.f32 %v568, %v577
      %579 = vst [vmem:[#allocation2 + $0x3] sm:$0x1] %v578
      %v580 = vld [vmem:[%s296] sm:$0xff]
      %v581 = vld [vmem:[%s296 + $0x8] sm:$0xff]
      %v582 = vld [vmem:[%s296 + $0x10] sm:$0xff]
      %v583 = vld [vmem:[%s296 + $0x18] sm:$0xff]
      %s584 = scalar_lea.vmem %s296, 32
      %v585 = vld [vmem:[%s584] sm:$0xff]
      %v586 = vld [vmem:[%s584 + $0x8] sm:$0xff]
      %v587 = vld [vmem:[%s584 + $0x10] sm:$0xff]
      %v588 = vld [vmem:[%s584 + $0x18] sm:$0xff]
      %s589 = scalar_lea.vmem %s296, 64
      %v590 = vld [vmem:[%s589] sm:$0xff]
      %v591 = vld [vmem:[%s589 + $0x8] sm:$0xff]
      %v592 = vld [vmem:[%s589 + $0x10] sm:$0xff]
      %v593 = vld [vmem:[%s589 + $0x18] sm:$0xff]
      %v594 = vmul.f32 %v580, 0.21697637
      %v595 = vmul.f32 %v581, 0.21697637
      %v596 = vmul.f32 %v582, 0.21697637
      %v597 = vmul.f32 %v583, 0.21697637
      %v598 = vmul.f32 %v585, 0.18810971
      %v599 = vmul.f32 %v586, 0.18810971
      %v600 = vmul.f32 %v587, 0.18810971
      %v601 = vmul.f32 %v588, 0.18810971
      %v602 = vadd.f32 %v594, %v598
      %v603 = vadd.f32 %v595, %v599
      %v604 = vadd.f32 %v596, %v600
      %v605 = vadd.f32 %v597, %v601
      %v606 = vmul.f32 %v590, 0.094913915
      %v607 = vmul.f32 %v591, 0.094913915
      %v608 = vmul.f32 %v592, 0.094913915
      %v609 = vmul.f32 %v593, 0.094913915
      %v610 = vadd.f32 %v602, %v606
      %v611 = vadd.f32 %v603, %v607
      %v612 = vadd.f32 %v604, %v608
      %v613 = vadd.f32 %v605, %v609
      %v614 = vadd.f32 %v610, 0.5
      %v615 = vadd.f32 %v611, 0.5
      %v616 = vadd.f32 %v612, 0.5
      %v617 = vadd.f32 %v613, 0.5
      %v618 = vmul.f32 %v580, 0.1063355
      %v619 = vmul.f32 %v581, 0.1063355
      %v620 = vmul.f32 %v582, 0.1063355
      %v621 = vmul.f32 %v583, 0.1063355
      %v622 = vmul.f32 %v585, 0.35758
      %v623 = vmul.f32 %v586, 0.35758
      %v624 = vmul.f32 %v587, 0.35758
      %v625 = vmul.f32 %v588, 0.35758
      %v626 = vadd.f32 %v618, %v622
      %v627 = vadd.f32 %v619, %v623
      %v628 = vadd.f32 %v620, %v624
      %v629 = vadd.f32 %v621, %v625
      %v630 = vmul.f32 %v590, 0.0360845
      %v631 = vmul.f32 %v591, 0.0360845
      %v632 = vmul.f32 %v592, 0.0360845
      %v633 = vmul.f32 %v593, 0.0360845
      %v634 = vadd.f32 %v626, %v630
      %v635 = vadd.f32 %v627, %v631
      %v636 = vadd.f32 %v628, %v632
      %v637 = vadd.f32 %v629, %v633
      %v638 = vadd.f32 %v634, 0.5
      %v639 = vadd.f32 %v635, 0.5
      %v640 = vadd.f32 %v636, 0.5
      %v641 = vadd.f32 %v637, 0.5
      %v642 = vmul.f32 %v580, 0.0088789575
      %v643 = vmul.f32 %v581, 0.0088789575
      %v644 = vmul.f32 %v582, 0.0088789575
      %v645 = vmul.f32 %v583, 0.0088789575
      %v646 = vmul.f32 %v585, 0.05473826
      %v647 = vmul.f32 %v586, 0.05473826
      %v648 = vmul.f32 %v587, 0.05473826
      %v649 = vmul.f32 %v588, 0.05473826
      %v650 = vadd.f32 %v642, %v646
      %v651 = vadd.f32 %v643, %v647
      %v652 = vadd.f32 %v644, %v648
      %v653 = vadd.f32 %v645, %v649
      %v654 = vmul.f32 %v590, 0.43638277
      %v655 = vmul.f32 %v591, 0.43638277
      %v656 = vmul.f32 %v592, 0.43638277
      %v657 = vmul.f32 %v593, 0.43638277
      %v658 = vadd.f32 %v650, %v654
      %v659 = vadd.f32 %v651, %v655
      %v660 = vadd.f32 %v652, %v656
      %v661 = vadd.f32 %v653, %v657
      %v662 = vadd.f32 %v658, 0.5
      %v663 = vadd.f32 %v659, 0.5
      %v664 = vadd.f32 %v660, 0.5
      %v665 = vadd.f32 %v661, 0.5
      %v666 = vmax.f32 %v614, 1e-12
      %v667 = vmax.f32 %v615, 1e-12
      %v668 = vmax.f32 %v616, 1e-12
      %v669 = vmax.f32 %v617, 1e-12
      %v670 = vpow.f32 %v666, 0.33333334
      %v671 = vpow.f32 %v667, 0.33333334
      %v672 = vpow.f32 %v668, 0.33333334
      %v673 = vpow.f32 %v669, 0.33333334
      %vm674 = vcmp.gt.f32.partialorder %v614, 0.008856
      %vm675 = vcmp.gt.f32.partialorder %v615, 0.008856
      %vm676 = vcmp.gt.f32.partialorder %v616, 0.008856
      %vm677 = vcmp.gt.f32.partialorder %v617, 0.008856
      %v678 = vmul.f32 %v614, 7.787
      %v679 = vmul.f32 %v615, 7.787
      %v680 = vmul.f32 %v616, 7.787
      %v681 = vmul.f32 %v617, 7.787
      %v682 = vadd.f32 %v678, 0.137931
      %v683 = vadd.f32 %v679, 0.137931
      %v684 = vadd.f32 %v680, 0.137931
      %v685 = vadd.f32 %v681, 0.137931
      %v686 = vsel %vm674, %v670, %v682
      %v687 = vsel %vm675, %v671, %v683
      %v688 = vsel %vm676, %v672, %v684
      %v689 = vsel %vm677, %v673, %v685
      %v690 = vmax.f32 %v638, 1e-12
      %v691 = vmax.f32 %v639, 1e-12
      %v692 = vmax.f32 %v640, 1e-12
      %v693 = vmax.f32 %v641, 1e-12
      %v694 = vpow.f32 %v690, 0.33333334
      %v695 = vpow.f32 %v691, 0.33333334
      %v696 = vpow.f32 %v692, 0.33333334
      %v697 = vpow.f32 %v693, 0.33333334
      %vm698 = vcmp.gt.f32.partialorder %v638, 0.008856
      %vm699 = vcmp.gt.f32.partialorder %v639, 0.008856
      %vm700 = vcmp.gt.f32.partialorder %v640, 0.008856
      %vm701 = vcmp.gt.f32.partialorder %v641, 0.008856
      %v702 = vmul.f32 %v638, 7.787
      %v703 = vmul.f32 %v639, 7.787
      %v704 = vmul.f32 %v640, 7.787
      %v705 = vmul.f32 %v641, 7.787
      %v706 = vadd.f32 %v702, 0.137931
      %v707 = vadd.f32 %v703, 0.137931
      %v708 = vadd.f32 %v704, 0.137931
      %v709 = vadd.f32 %v705, 0.137931
      %v710 = vsel %vm698, %v694, %v706
      %v711 = vsel %vm699, %v695, %v707
      %v712 = vsel %vm700, %v696, %v708
      %v713 = vsel %vm701, %v697, %v709
      %v714 = vmax.f32 %v662, 1e-12
      %v715 = vmax.f32 %v663, 1e-12
      %v716 = vmax.f32 %v664, 1e-12
      %v717 = vmax.f32 %v665, 1e-12
      %v718 = vpow.f32 %v714, 0.33333334
      %v719 = vpow.f32 %v715, 0.33333334
      %v720 = vpow.f32 %v716, 0.33333334
      %v721 = vpow.f32 %v717, 0.33333334
      %vm722 = vcmp.gt.f32.partialorder %v662, 0.008856
      %vm723 = vcmp.gt.f32.partialorder %v663, 0.008856
      %vm724 = vcmp.gt.f32.partialorder %v664, 0.008856
      %vm725 = vcmp.gt.f32.partialorder %v665, 0.008856
      %v726 = vmul.f32 %v662, 7.787
      %v727 = vmul.f32 %v663, 7.787
      %v728 = vmul.f32 %v664, 7.787
      %v729 = vmul.f32 %v665, 7.787
      %v730 = vadd.f32 %v726, 0.137931
      %v731 = vadd.f32 %v727, 0.137931
      %v732 = vadd.f32 %v728, 0.137931
      %v733 = vadd.f32 %v729, 0.137931
      %v734 = vsel %vm722, %v718, %v730
      %v735 = vsel %vm723, %v719, %v731
      %v736 = vsel %vm724, %v720, %v732
      %v737 = vsel %vm725, %v721, %v733
      %v738 = vmul.f32 %v710, 116.0
      %v739 = vmul.f32 %v711, 116.0
      %v740 = vmul.f32 %v712, 116.0
      %v741 = vmul.f32 %v713, 116.0
      %v742 = vsub.f32 %v738, 16.0
      %v743 = vsub.f32 %v739, 16.0
      %v744 = vsub.f32 %v740, 16.0
      %v745 = vsub.f32 %v741, 16.0
      %v746 = vmul.f32 %v638, 903.3
      %v747 = vmul.f32 %v639, 903.3
      %v748 = vmul.f32 %v640, 903.3
      %v749 = vmul.f32 %v641, 903.3
      %v750 = vsel %vm698, %v742, %v746
      %v751 = vsel %vm699, %v743, %v747
      %v752 = vsel %vm700, %v744, %v748
      %v753 = vsel %vm701, %v745, %v749
      %v754 = vsub.f32 %v686, %v710
      %v755 = vsub.f32 %v687, %v711
      %v756 = vsub.f32 %v688, %v712
      %v757 = vsub.f32 %v689, %v713
      %v758 = vmul.f32 %v754, 500.0
      %v759 = vmul.f32 %v755, 500.0
      %v760 = vmul.f32 %v756, 500.0
      %v761 = vmul.f32 %v757, 500.0
      %v762 = vsub.f32 %v710, %v734
      %v763 = vsub.f32 %v711, %v735
      %v764 = vsub.f32 %v712, %v736
      %v765 = vsub.f32 %v713, %v737
      %v766 = vmul.f32 %v762, 200.0
      %v767 = vmul.f32 %v763, 200.0
      %v768 = vmul.f32 %v764, 200.0
      %v769 = vmul.f32 %v765, 200.0
      %v770 = vld [vmem:[%s311] sm:$0xff]
      %v771 = vunpack.c.0.s8 %v770
      %v772 = vunpack.c.1.s8 %v770
      %v773 = vunpack.c.2.s8 %v770
      %v774 = vunpack.c.3.s8 %v770
      %v775 = vcvt.s32.f32 %v771
      %v776 = vcvt.s32.f32 %v772
      %v777 = vcvt.s32.f32 %v773
      %v778 = vcvt.s32.f32 %v774
      %v779 = vld [vmem:[#allocation2 + $0x4] sm:$0x1]
      %v780 = vmul.f32 %v750, %v775
      %v781 = vmul.f32 %v751, %v776
      %v782 = vmul.f32 %v752, %v777
      %v783 = vmul.f32 %v753, %v778
      %v784 = vadd.f32 %v780, %v781
      %v785 = vadd.f32 %v784, %v782
      %v786 = vadd.f32 %v785, %v783
      %v787 = vrot.slane %v786, 4
      %v788 = vadd.f32 %v786, %v787
      %v789 = vrot.slane %v788, 2
      %v790 = vadd.f32 %v788, %v789
      %v791 = vrot.slane %v790, 1
      %v792 = vadd.f32 %v790, %v791
      %v793 = vadd.f32 %v779, %v792
      %794 = vst [vmem:[#allocation2 + $0x4] sm:$0x1] %v793
      %v795 = vld [vmem:[#allocation2 + $0x5] sm:$0x1]
      %v796 = vmul.f32 %v758, %v775
      %v797 = vmul.f32 %v759, %v776
      %v798 = vmul.f32 %v760, %v777
      %v799 = vmul.f32 %v761, %v778
      %v800 = vadd.f32 %v796, %v797
      %v801 = vadd.f32 %v800, %v798
      %v802 = vadd.f32 %v801, %v799
      %v803 = vrot.slane %v802, 4
      %v804 = vadd.f32 %v802, %v803
      %v805 = vrot.slane %v804, 2
      %v806 = vadd.f32 %v804, %v805
      %v807 = vrot.slane %v806, 1
      %v808 = vadd.f32 %v806, %v807
      %v809 = vadd.f32 %v795, %v808
      %810 = vst [vmem:[#allocation2 + $0x5] sm:$0x1] %v809
      %v811 = vld [vmem:[#allocation2 + $0x6] sm:$0x1]
      %v812 = vmul.f32 %v766, %v775
      %v813 = vmul.f32 %v767, %v776
      %v814 = vmul.f32 %v768, %v777
      %v815 = vmul.f32 %v769, %v778
      %v816 = vadd.f32 %v812, %v813
      %v817 = vadd.f32 %v816, %v814
      %v818 = vadd.f32 %v817, %v815
      %v819 = vrot.slane %v818, 4
      %v820 = vadd.f32 %v818, %v819
      %v821 = vrot.slane %v820, 2
      %v822 = vadd.f32 %v820, %v821
      %v823 = vrot.slane %v822, 1
      %v824 = vadd.f32 %v822, %v823
      %v825 = vadd.f32 %v811, %v824
      %826 = vst [vmem:[#allocation2 + $0x6] sm:$0x1] %v825
      %v827 = vld [vmem:[#allocation2 + $0x7] sm:$0x1]
      %v828 = vadd.f32 %v775, %v776
      %v829 = vadd.f32 %v828, %v777
      %v830 = vadd.f32 %v829, %v778
      %v831 = vrot.slane %v830, 4
      %v832 = vadd.f32 %v830, %v831
      %v833 = vrot.slane %v832, 2
      %v834 = vadd.f32 %v832, %v833
      %v835 = vrot.slane %v834, 1
      %v836 = vadd.f32 %v834, %v835
      %v837 = vadd.f32 %v827, %v836
      %838 = vst [vmem:[#allocation2 + $0x7] sm:$0x1] %v837
      // Predicated region
      $region41: #{avg_lab_loss.1} parent=35 // pred_check
        %p839 = pneg %p316
      $region42: #{avg_lab_loss.1} parent=35 // pred_check_branch
        %841 = sbr.rel (%p839) target = $region44
      $region43: #{avg_lab_loss.1} parent=35 // pred_region
        %v842 = vld [vmem:[#allocation2] sm:$0xff]
        %843 = vst [vmem:[%s315] sm:$0xff] %v842
      $region44: #{avg_lab_loss.1} parent=35 // pred_fallthru
        _
      %p844 = scmp.lt.s32.totalorder %s19, 1
      %s845 = scalar_select %p844, %s19, 1
      %s846 = smul.addr %s845, 8
      %s847 = scalar_lea.vmem %s4, %s846
      // Predicated region
      $region45: #{avg_lab_loss.1} parent=35 // pred_check
        %p848 = pneg %p157
      $region46: #{avg_lab_loss.1} parent=35 // pred_check_branch
        %850 = sbr.rel (%p848) target = $region48
      $region47: #{avg_lab_loss.1} parent=35 // pred_region
        _
      $region48: #{avg_lab_loss.1} parent=35 // pred_fallthru
        _
    $region36: #{avg_lab_loss.1} parent=5 // pred_fallthru
      _
    %p851 = scmp.le.s32.totalorder 2, %s10
    // Predicated region
    $region49: #{avg_lab_loss.1} parent=5 // pred_check
      %p852 = pneg %p851
    $region50: #{avg_lab_loss.1} parent=5 // pred_check_branch
      %854 = sbr.rel (%p852) target = $region52
    $region51: #{avg_lab_loss.1} parent=5 // pred_region
      %s855 = ssub.s32 %s10, 2
      // Predicated region
      $region53: #{avg_lab_loss.1} parent=51 // pred_check
        %p856 = pneg %p163
      $region54: #{avg_lab_loss.1} parent=51 // pred_check_branch
        %858 = sbr.rel (%p856) target = $region56
      $region55: #{avg_lab_loss.1} parent=51 // pred_region
        %p859 = scmp.lt.s32.totalorder %s21, 1
        %s860 = scalar_select %p859, %s21, 1
        %s861 = smul.addr %s860, 8
        %s862 = scalar_lea.vmem %s4, %s861
      $region56: #{avg_lab_loss.1} parent=51 // pred_fallthru
        _
    $region52: #{avg_lab_loss.1} parent=5 // pred_fallthru
      _
  $region6: #{avg_lab_loss.1} parent=0 // loop_footer
    %s14 = sadd.s32 1, %s10
  $region7: #{avg_lab_loss.1} parent=0 // loop_footer_branch
    %9 = sbr.rel target = $region3
  $region8: #{avg_lab_loss.1} parent=0 // loop_exit
    _

</llo_original>
